<compile_context>
chip_gen: v7x
topology: tpu7x:2x2x1
jax: 0.10.0
libtpu: 0.0.40
codegen_flags: <defaults>
</compile_context>

<pallas_src>
import jax
import jax.numpy as jnp
from jax.experimental import pallas as pl
from jax.experimental.pallas import tpu as pltpu


# --------------------------------------------------------------------------- #
# Fused passthrough kernel (identity on both tensors, single launch)          #
# --------------------------------------------------------------------------- #
def _fused_passthrough_kernel(x_ref, h_ref, xo_ref, ho_ref):
    # Big tensor: copy the current (tile_m, L) tile.
    xo_ref[...] = x_ref[...]

    # Tiny tensor: single resident block, written once at the first grid step.
    @pl.when(pl.program_id(0) == 0)
    def _():
        ho_ref[...] = h_ref[...]


def _lane_dense_2d(x: jax.Array) -> jax.Array:
    """Flatten to 2D with a lane-dense (multiple-of-128) last dim when possible."""
    total = x.size
    if total % 128 == 0:
        return x.reshape(total // 128, 128)
    return x.reshape(-1, x.shape[-1])


def _pick_tile_m(m: int, row_bytes: int) -> int:
    """Largest row-tile (multiple of 8, dividing m) under ~1 MiB per block.

    Keeps double-buffered (in + out) tiles well below the scoped VMEM limit on
    every generation (incl. v7x's 64 MiB physical / 32 MiB default scoped).
    """
    max_rows = max(8, (1 << 20) // max(1, row_bytes))
    for cand in (1024, 512, 256, 128, 64, 32, 16, 8):
        if cand <= max_rows and m % cand == 0:
            return cand
    return m  # fall back to a single full-extent block (exempt from 8x128 rule)


def _fused_passthrough_impl(inputs: jax.Array, hidden_states: jax.Array):
    x2 = _lane_dense_2d(inputs)
    h2 = _lane_dense_2d(hidden_states)

    m, lane = x2.shape
    tile_m = _pick_tile_m(m, lane * x2.dtype.itemsize)
    grid = (m // tile_m,)

    out_x2, out_h2 = pl.pallas_call(
        _fused_passthrough_kernel,
        out_shape=(
            jax.ShapeDtypeStruct(x2.shape, x2.dtype),
            jax.ShapeDtypeStruct(h2.shape, h2.dtype),
        ),
        grid=grid,
        in_specs=[
            pl.BlockSpec((tile_m, lane), lambda i: (i, 0)),
            pl.BlockSpec(h2.shape, lambda i: (0, 0)),  # resident, untiled block
        ],
        out_specs=[
            pl.BlockSpec((tile_m, lane), lambda i: (i, 0)),
            pl.BlockSpec(h2.shape, lambda i: (0, 0)),  # revisited -> resident
        ],
        # Identity: alias inputs to outputs (no extra output write stream when
        # the caller donates; XLA inserts a copy otherwise).
        input_output_aliases={0: 0, 1: 1},
        # "arbitrary" because the hidden_states output block is revisited
        # across the grid (resident accumulator pattern); measured cost vs
        # "parallel" is near zero for this mem-bound kernel.
        compiler_params=pltpu.CompilerParams(
            dimension_semantics=("arbitrary",),
        ),
    )(x2, h2)

    return out_x2.reshape(inputs.shape), out_h2.reshape(hidden_states.shape)


fused_passthrough = jax.jit(_fused_passthrough_impl)


# --------------------------------------------------------------------------- #
# Model                                                                       #
# --------------------------------------------------------------------------- #
class MarkovModel:
    """JAX/Pallas port of the (empty) PyTorch MarkovModel.

    The reference forward body is `pass`: it returns None and computes nothing.
    The fastest faithful implementation therefore launches zero kernels.  Set
    `debug_passthrough=True` to route both tensors through the fused Pallas
    passthrough kernel (identity) before returning None.
    """

    def __init__(self, debug_passthrough: bool = False) -> None:
        self.debug_passthrough = debug_passthrough

    def forward(self, inputs: jax.Array, hidden_states: jax.Array) -> None:
        if self.debug_passthrough:
            # Single fused launch; no host sync (async dispatch preserved).
            fused_passthrough(inputs, hidden_states)
        return None

    __call__ = forward


# --------------------------------------------------------------------------- #
# Demo / correctness check                                                    #
# --------------------------------------------------------------------------- #
if __name__ == "__main__":
    key = jax.random.PRNGKey(0)
    k1, k2 = jax.random.split(key)

    batch, seq, hidden = 2, 8, 32
    inputs = jax.random.normal(k1, (batch, seq, hidden), dtype=jnp.float32)
    hidden_states = jax.random.normal(k2, (batch, hidden), dtype=jnp.float32)

    # Faithful forward: no kernels, returns None (matches the PyTorch module).
    model = MarkovModel()
    result = model(inputs, hidden_states)
    assert result is None

    # Exercise the fused Pallas kernel once and block on its result.
    out_x, out_h = fused_passthrough(inputs, hidden_states)
    jax.block_until_ready((out_x, out_h))

    assert out_x.shape == inputs.shape and out_x.dtype == inputs.dtype
    assert out_h.shape == hidden_states.shape and out_h.dtype == hidden_states.dtype
    assert bool(jnp.array_equal(out_x, inputs))
    assert bool(jnp.array_equal(out_h, hidden_states))

    print("KERNEL_OK")
</pallas_src>

<mosaic_0001>
module attributes {stable_mosaic.version = 11 : i64} {
  func.func @_fused_passthrough_kernel(%arg0: i32, %arg1: memref<4x128xf32, #tpu.memory_space<vmem>>, %arg2: memref<2x32xf32, #tpu.memory_space<vmem>>, %arg3: memref<4x128xf32, #tpu.memory_space<vmem>>, %arg4: memref<2x32xf32, #tpu.memory_space<vmem>>) attributes {dimension_semantics = [#tpu.dimension_semantics<arbitrary>], iteration_bounds = array<i64: 1>, scalar_prefetch = 0 : i64, scratch_operands = 0 : i64, tpu.core_type = #tpu.core_type<tc>, window_params = [{transform_indices = @transform_0, window_bounds = array<i64: 4, 128>}, {pipeline_mode = #tpu.pipeline_mode<synchronous>, transform_indices = @transform_1, window_bounds = array<i64: 2, 32>}, {transform_indices = @transform_2, window_bounds = array<i64: 4, 128>}, {pipeline_mode = #tpu.pipeline_mode<synchronous>, transform_indices = @transform_3, window_bounds = array<i64: 2, 32>}]} {
    %c0 = arith.constant 0 : index
    %c0_0 = arith.constant 0 : index
    %0 = vector.load %arg1[%c0, %c0_0] : memref<4x128xf32, #tpu.memory_space<vmem>>, vector<4x128xf32>
    %c0_1 = arith.constant 0 : index
    %c0_2 = arith.constant 0 : index
    %1 = vector.load %arg3[%c0_1, %c0_2] : memref<4x128xf32, #tpu.memory_space<vmem>>, vector<4x128xf32>
    tpu.vector_store %arg3[%c0_1, %c0_2], %0 {strides = array<i32>} : memref<4x128xf32, #tpu.memory_space<vmem>>, vector<4x128xf32>,
    %c0_i32 = arith.constant 0 : i32
    %2 = arith.cmpi eq, %arg0, %c0_i32 : i32
    %3 = arith.extui %2 : i1 to i32
    %c0_i32_3 = arith.constant 0 : i32
    %4 = arith.cmpi ne, %3, %c0_i32_3 : i32
    scf.if %4 {
      %c0_4 = arith.constant 0 : index
      %c0_5 = arith.constant 0 : index
      %5 = vector.load %arg2[%c0_4, %c0_5] : memref<2x32xf32, #tpu.memory_space<vmem>>, vector<2x32xf32>
      %c0_6 = arith.constant 0 : index
      %c0_7 = arith.constant 0 : index
      %6 = vector.load %arg4[%c0_6, %c0_7] : memref<2x32xf32, #tpu.memory_space<vmem>>, vector<2x32xf32>
      tpu.vector_store %arg4[%c0_6, %c0_7], %5 {strides = array<i32>} : memref<2x32xf32, #tpu.memory_space<vmem>>, vector<2x32xf32>,
    } else {
    }
    return
  }
  func.func @transform_0(%arg0: i32) -> (i32, i32) {
    %c0_i32 = arith.constant 0 : i32
    %c0_i32_0 = arith.constant 0 : i32
    return %arg0, %c0_i32 : i32, i32
  }
  func.func @transform_1(%arg0: i32) -> (i32, i32) {
    %c0_i32 = arith.constant 0 : i32
    %c0_i32_0 = arith.constant 0 : i32
    %c0_i32_1 = arith.constant 0 : i32
    return %c0_i32, %c0_i32_0 : i32, i32
  }
  func.func @transform_2(%arg0: i32) -> (i32, i32) {
    %c0_i32 = arith.constant 0 : i32
    %c0_i32_0 = arith.constant 0 : i32
    return %arg0, %c0_i32 : i32, i32
  }
  func.func @transform_3(%arg0: i32) -> (i32, i32) {
    %c0_i32 = arith.constant 0 : i32
    %c0_i32_0 = arith.constant 0 : i32
    %c0_i32_1 = arith.constant 0 : i32
    return %c0_i32, %c0_i32_0 : i32, i32
  }
}

</mosaic_0001>

<llo_original>
// kernel: _fused_passthrough_impl.1
$region0: #{_fused_passthrough_impl.1}
  #allocation0 [shape = 'u32[]', space=smem, size = 0x4, offset = 0x4, fixed_abs, tag = 'smem constant byte address 0x4 - core index']
  #allocation1 [shape = 'u32[144,128]{1,0:T(1,128)}', space=vmem, size = 0x12000, scoped, tag = 'internal scratch']
  %s0 = inlined_call_operand.vmem [shape: f32[4,128], index: 0, kind: input, shape index: {}, may-alias: {0,2}]
  %s1 = inlined_call_operand.vmem [shape: f32[2,32], index: 1, kind: input, shape index: {}, may-alias: {1,3}]
  %s2 = inlined_call_operand.vmem [shape: f32[4,128], index: 2, kind: output, shape index: {0}, may-alias: {0,2}]
  %s3 = inlined_call_operand.vmem [shape: f32[2,32], index: 3, kind: output, shape index: {1}, may-alias: {1,3}]
  %4 = xla_tuple %s2, %s3
  %s5 = sld [smem:[#allocation0]]
  $region30: #{_fused_passthrough_impl.1} parent=0
    _
  %s7 = ssub.s32 1, %s5
  %s8 = scalar_select 0, %s7, %s5
  // Predicated region
  $region2: #{_fused_passthrough_impl.1} parent=0 // pred_check
    _
  $region3: #{_fused_passthrough_impl.1} parent=0 // pred_check_branch
    %10 = sbr.rel (0) target = $region5
  $region4: #{_fused_passthrough_impl.1} parent=0 // pred_region
    _
  $region5: #{_fused_passthrough_impl.1} parent=0 // pred_fallthru
    _
  // Predicated region
  $region6: #{_fused_passthrough_impl.1} parent=0 // pred_check
    _
  $region7: #{_fused_passthrough_impl.1} parent=0 // pred_check_branch
    %12 = sbr.rel (0) target = $region9
  $region8: #{_fused_passthrough_impl.1} parent=0 // pred_region
    _
  $region9: #{_fused_passthrough_impl.1} parent=0 // pred_fallthru
    _
  %v13 = vld [vmem:[%s0] sm:$0xf]
  %14 = vst [vmem:[%s2] sm:$0xf] %v13
  %p15 = scmp.eq.s32.totalorder 0, 0
  // Predicated region
  $region10: #{_fused_passthrough_impl.1} parent=0 // pred_check
    %p16 = pneg %p15
  $region11: #{_fused_passthrough_impl.1} parent=0 // pred_check_branch
    %18 = sbr.rel (%p16) target = $region13
  $region12: #{_fused_passthrough_impl.1} parent=0 // pred_region
    %v19 = vld [vmem:[%s1] sm:$0x3]
    %vm20 = vcmask 254976
    %21 = vst.msk [vmem:[%s3] sm:$0x3] %vm20, %v19
  $region13: #{_fused_passthrough_impl.1} parent=0 // pred_fallthru
    _
  // Predicated region
  $region14: #{_fused_passthrough_impl.1} parent=0 // pred_check
    _
  $region15: #{_fused_passthrough_impl.1} parent=0 // pred_check_branch
    %23 = sbr.rel (0) target = $region17
  $region16: #{_fused_passthrough_impl.1} parent=0 // pred_region
    _
  $region17: #{_fused_passthrough_impl.1} parent=0 // pred_fallthru
    _
  // Predicated region
  $region18: #{_fused_passthrough_impl.1} parent=0 // pred_check
    _
  $region19: #{_fused_passthrough_impl.1} parent=0 // pred_check_branch
    %25 = sbr.rel (0) target = $region21
  $region20: #{_fused_passthrough_impl.1} parent=0 // pred_region
    _
  $region21: #{_fused_passthrough_impl.1} parent=0 // pred_fallthru
    _
  // Predicated region
  $region22: #{_fused_passthrough_impl.1} parent=0 // pred_check
    _
  $region23: #{_fused_passthrough_impl.1} parent=0 // pred_check_branch
    %27 = sbr.rel (0) target = $region25
  $region24: #{_fused_passthrough_impl.1} parent=0 // pred_region
    _
  $region25: #{_fused_passthrough_impl.1} parent=0 // pred_fallthru
    _
  // Predicated region
  $region26: #{_fused_passthrough_impl.1} parent=0 // pred_check
    _
  $region27: #{_fused_passthrough_impl.1} parent=0 // pred_check_branch
    %29 = sbr.rel (0) target = $region29
  $region28: #{_fused_passthrough_impl.1} parent=0 // pred_region
    _
  $region29: #{_fused_passthrough_impl.1} parent=0 // pred_fallthru
    _

</llo_original>
